<compile_context>
chip_gen: v5e
topology: v5e:2x2
jax: 0.10.0
libtpu: 0.0.40
codegen_flags: <defaults>
</compile_context>

<pallas_src>
import jax
import jax.numpy as jnp
from jax.experimental import pallas as pl
from jax.experimental.pallas import tpu as pltpu

EPS = 1e-5
HW = 81  # 9 * 9, fixed by the module


# ------------- fused kernel: conv1x1 + BN(train) + relu + fc1 + relu + fc2 -----------------
def value_block_kernel(x_ref, wbig_ref, cb_ref, gamma_ref, beta_ref, pavg_ref,
                       w1_ref, b1_ref, w2_ref, b2_ref, o_ref):
    # x_ref:    (B, C_in*81)   NCHW flatten of the input (free reshape, lane-dense)
    # wbig_ref: (C_in*81, F)   kron(Wc^T, I_81), F = n_channels*81
    # cb_ref/gamma_ref/beta_ref: (1, F) per-channel params repeated over the 81 spatial lanes
    # pavg_ref: (F, F)         block-averaging matrix: 1/(B*81) iff same channel block
    # w1_ref:   (F, n_hidden), b1_ref: (1, n_hidden)
    # w2_ref:   (1, n_hidden), b2_ref: (1, 1)
    # o_ref:    (B, 1)

    # 1x1 conv as one lane-dense MXU matmul; output is already in NCHW-flatten order.
    y = jnp.dot(x_ref[...], wbig_ref[...],
                preferred_element_type=jnp.float32) + cb_ref[...]          # (B, F)

    # BatchNorm2d (training mode): per-channel mean/var over (N, H, W), biased variance.
    # Channels are contiguous 81-lane blocks; the per-channel reduce+broadcast over lanes
    # is a single matmul against the precomputed block-averaging matrix (MXU, no scalar
    # round-trips).  Two-pass variance for numerical safety.
    col_sum = jnp.sum(y, axis=0, keepdims=True)                            # (1, F) sublane reduce
    mean_row = jnp.dot(col_sum, pavg_ref[...],
                       preferred_element_type=jnp.float32)                 # (1, F)
    d = y - mean_row                                                       # centered
    col_ss = jnp.sum(d * d, axis=0, keepdims=True)                         # (1, F)
    var_row = jnp.dot(col_ss, pavg_ref[...],
                      preferred_element_type=jnp.float32)                  # (1, F)

    # Folded BN affine: one FMA per element, then ReLU.
    scale_row = gamma_ref[...] * jax.lax.rsqrt(var_row + EPS)
    a = jnp.maximum(d * scale_row + beta_ref[...], 0.0)                    # (B, F)

    # fc1 (the one non-degenerate matmul -> MXU) + ReLU.
    h = jnp.dot(a, w1_ref[...], preferred_element_type=jnp.float32) + b1_ref[...]
    h = jnp.maximum(h, 0.0)                                                # (B, n_hidden)

    # fc2 (N=1): VPU multiply + lane reduction instead of an N=1 MXU matmul.
    o_ref[...] = jnp.sum(h * w2_ref[...], axis=-1, keepdims=True) + b2_ref[...]


def value_block_forward(x, params):
    """x: (B, C_in, 9, 9) float32 (NCHW). Returns (B, 1) float32."""
    B, C_in, H, W = x.shape
    assert (H, W) == (9, 9)
    n_ch = params["conv_w"].shape[0]
    n_hidden = params["fc1_w"].shape[0]
    F = n_ch * HW

    # Free, layout-preserving view of the NCHW input (no runtime transpose).
    xf = x.reshape(B, C_in * HW)

    # --- host-side weight preparation (tiny, one-time; never touches activations) ---
    wc2 = params["conv_w"].reshape(n_ch, C_in)
    # Kron-expanded 1x1-conv weight: y_flat = xf @ kron(Wc^T, I_81)  (NCHW-flatten order).
    wbig = jnp.kron(wc2.T, jnp.eye(HW, dtype=jnp.float32))                 # (C_in*81, F)
    cb_row = jnp.repeat(params["conv_b"], HW).reshape(1, F)
    gamma_row = jnp.repeat(params["bn_gamma"], HW).reshape(1, F)
    beta_row = jnp.repeat(params["bn_beta"], HW).reshape(1, F)
    # Block-averaging matrix for BN batch statistics (per-channel reduce + broadcast).
    chan = jnp.arange(F, dtype=jnp.int32) // HW
    pavg = (chan[:, None] == chan[None, :]).astype(jnp.float32) / float(B * HW)  # (F, F)
    w1 = params["fc1_w"].T                                                 # (F, n_hidden)
    b1 = params["fc1_b"].reshape(1, n_hidden)
    w2 = params["fc2_w"].reshape(1, n_hidden)
    b2 = params["fc2_b"].reshape(1, 1)

    vmem = pl.BlockSpec(memory_space=pltpu.MemorySpace.VMEM)
    return pl.pallas_call(
        value_block_kernel,
        out_shape=jax.ShapeDtypeStruct((B, 1), jnp.float32),
        in_specs=[vmem] * 10,
        out_specs=vmem,
    )(xf, wbig, cb_row, gamma_row, beta_row, pavg, w1, b1, w2, b2)


# ------------------------------ pure-JAX reference (for verification) ----------------------
def value_block_reference(x, params):
    B, C_in, H, W = x.shape
    n_ch = params["conv_w"].shape[0]
    wc = params["conv_w"].reshape(n_ch, C_in)
    y = jnp.einsum("bihw,ci->bchw", x, wc) + params["conv_b"][None, :, None, None]
    mean = jnp.mean(y, axis=(0, 2, 3), keepdims=True)
    var = jnp.mean((y - mean) ** 2, axis=(0, 2, 3), keepdims=True)
    y = (y - mean) / jnp.sqrt(var + EPS)
    y = y * params["bn_gamma"][None, :, None, None] + params["bn_beta"][None, :, None, None]
    y = jnp.maximum(y, 0.0)
    f = y.reshape(B, n_ch * H * W)
    h = jnp.maximum(f @ params["fc1_w"].T + params["fc1_b"], 0.0)
    return h @ params["fc2_w"].T + params["fc2_b"]


def init_params(key, in_channels, n_channels=3, n_hidden=64):
    ks = jax.random.split(key, 6)

    def unif(k, shape, fan_in):
        bound = 1.0 / jnp.sqrt(float(fan_in))
        return jax.random.uniform(k, shape, jnp.float32, -bound, bound)

    return {
        "conv_w": unif(ks[0], (n_channels, in_channels, 1, 1), in_channels),
        "conv_b": unif(ks[1], (n_channels,), in_channels),
        "bn_gamma": jnp.ones((n_channels,), jnp.float32),
        "bn_beta": jnp.zeros((n_channels,), jnp.float32),
        "fc1_w": unif(ks[2], (n_hidden, n_channels * 9 * 9), n_channels * 9 * 9),
        "fc1_b": unif(ks[3], (n_hidden,), n_channels * 9 * 9),
        "fc2_w": unif(ks[4], (1, n_hidden), n_hidden),
        "fc2_b": unif(ks[5], (1,), n_hidden),
    }


if __name__ == "__main__":
    key = jax.random.PRNGKey(0)
    k_x, k_p = jax.random.split(key)

    B, in_channels = 2, 4
    x = jax.random.normal(k_x, (B, in_channels, 9, 9), jnp.float32)
    params = init_params(k_p, in_channels, n_channels=3, n_hidden=64)

    out = jax.block_until_ready(jax.jit(value_block_forward)(x, params))
    ref = jax.block_until_ready(value_block_reference(x, params))

    assert out.shape == (B, 1), out.shape
    assert jnp.allclose(out, ref, atol=2e-4, rtol=2e-4), (out, ref)
    print("KERNEL_OK")
</pallas_src>

<mosaic_0001>
module attributes {stable_mosaic.version = 11 : i64} {
  func.func @value_block_kernel(%arg0: memref<2x324xf32, #tpu.memory_space<vmem>>, %arg1: memref<324x243xf32, #tpu.memory_space<vmem>>, %arg2: memref<1x243xf32, #tpu.memory_space<vmem>>, %arg3: memref<1x243xf32, #tpu.memory_space<vmem>>, %arg4: memref<1x243xf32, #tpu.memory_space<vmem>>, %arg5: memref<243x243xf32, #tpu.memory_space<vmem>>, %arg6: memref<243x64xf32, #tpu.memory_space<vmem>>, %arg7: memref<1x64xf32, #tpu.memory_space<vmem>>, %arg8: memref<1x64xf32, #tpu.memory_space<vmem>>, %arg9: memref<1x1xf32, #tpu.memory_space<vmem>>, %arg10: memref<2x1xf32, #tpu.memory_space<vmem>>) attributes {dimension_semantics = [], scalar_prefetch = 0 : i64, scratch_operands = 0 : i64, tpu.core_type = #tpu.core_type<tc>} {
    %c0 = arith.constant 0 : index
    %c0_0 = arith.constant 0 : index
    %0 = vector.load %arg0[%c0, %c0_0] : memref<2x324xf32, #tpu.memory_space<vmem>>, vector<2x324xf32>
    %c0_1 = arith.constant 0 : index
    %c0_2 = arith.constant 0 : index
    %1 = vector.load %arg1[%c0_1, %c0_2] : memref<324x243xf32, #tpu.memory_space<vmem>>, vector<324x243xf32>
    %cst = arith.constant dense<0.000000e+00> : vector<2x243xf32>
    %2 = tpu.matmul %0, %1, %cst {dimension_numbers = #tpu.dot_dimension_numbers<[1], [0], [0], [1], [0, 0, 1, 1], [], []>} : vector<2x324xf32>, vector<324x243xf32>, vector<2x243xf32> -> vector<2x243xf32>
    %c0_3 = arith.constant 0 : index
    %c0_4 = arith.constant 0 : index
    %3 = vector.load %arg2[%c0_3, %c0_4] : memref<1x243xf32, #tpu.memory_space<vmem>>, vector<1x243xf32>
    %4 = vector.broadcast %3 : vector<1x243xf32> to vector<2x243xf32>
    %5 = arith.addf %2, %4 : vector<2x243xf32>
    %cst_5 = arith.constant dense<0.000000e+00> : vector<243xf32>
    %6 = vector.multi_reduction <add>, %5, %cst_5 [0] : vector<2x243xf32> to vector<243xf32>
    %7 = vector.shape_cast %6 : vector<243xf32> to vector<1x243xf32>
    %c0_6 = arith.constant 0 : index
    %c0_7 = arith.constant 0 : index
    %8 = vector.load %arg5[%c0_6, %c0_7] : memref<243x243xf32, #tpu.memory_space<vmem>>, vector<243x243xf32>
    %cst_8 = arith.constant dense<0.000000e+00> : vector<1x243xf32>
    %9 = tpu.matmul %7, %8, %cst_8 {dimension_numbers = #tpu.dot_dimension_numbers<[1], [0], [0], [1], [0, 0, 1, 1], [], []>} : vector<1x243xf32>, vector<243x243xf32>, vector<1x243xf32> -> vector<1x243xf32>
    %10 = vector.broadcast %9 : vector<1x243xf32> to vector<2x243xf32>
    %11 = arith.subf %5, %10 : vector<2x243xf32>
    %12 = arith.mulf %11, %11 : vector<2x243xf32>
    %cst_9 = arith.constant dense<0.000000e+00> : vector<243xf32>
    %13 = vector.multi_reduction <add>, %12, %cst_9 [0] : vector<2x243xf32> to vector<243xf32>
    %14 = vector.shape_cast %13 : vector<243xf32> to vector<1x243xf32>
    %c0_10 = arith.constant 0 : index
    %c0_11 = arith.constant 0 : index
    %15 = vector.load %arg5[%c0_10, %c0_11] : memref<243x243xf32, #tpu.memory_space<vmem>>, vector<243x243xf32>
    %cst_12 = arith.constant dense<0.000000e+00> : vector<1x243xf32>
    %16 = tpu.matmul %14, %15, %cst_12 {dimension_numbers = #tpu.dot_dimension_numbers<[1], [0], [0], [1], [0, 0, 1, 1], [], []>} : vector<1x243xf32>, vector<243x243xf32>, vector<1x243xf32> -> vector<1x243xf32>
    %c0_13 = arith.constant 0 : index
    %c0_14 = arith.constant 0 : index
    %17 = vector.load %arg3[%c0_13, %c0_14] : memref<1x243xf32, #tpu.memory_space<vmem>>, vector<1x243xf32>
    %cst_15 = arith.constant 9.99999974E-6 : f32
    %18 = vector.broadcast %cst_15 : f32 to vector<1x243xf32>
    %19 = arith.addf %16, %18 : vector<1x243xf32>
    %20 = math.rsqrt %19 : vector<1x243xf32>
    %21 = arith.mulf %17, %20 : vector<1x243xf32>
    %22 = vector.broadcast %21 : vector<1x243xf32> to vector<2x243xf32>
    %23 = arith.mulf %11, %22 : vector<2x243xf32>
    %c0_16 = arith.constant 0 : index
    %c0_17 = arith.constant 0 : index
    %24 = vector.load %arg4[%c0_16, %c0_17] : memref<1x243xf32, #tpu.memory_space<vmem>>, vector<1x243xf32>
    %25 = vector.broadcast %24 : vector<1x243xf32> to vector<2x243xf32>
    %26 = arith.addf %23, %25 : vector<2x243xf32>
    %cst_18 = arith.constant 0.000000e+00 : f32
    %27 = vector.broadcast %cst_18 : f32 to vector<2x243xf32>
    %28 = arith.maximumf %26, %27 : vector<2x243xf32>
    %c0_19 = arith.constant 0 : index
    %c0_20 = arith.constant 0 : index
    %29 = vector.load %arg6[%c0_19, %c0_20] : memref<243x64xf32, #tpu.memory_space<vmem>>, vector<243x64xf32>
    %cst_21 = arith.constant dense<0.000000e+00> : vector<2x64xf32>
    %30 = tpu.matmul %28, %29, %cst_21 {dimension_numbers = #tpu.dot_dimension_numbers<[1], [0], [0], [1], [0, 0, 1, 1], [], []>} : vector<2x243xf32>, vector<243x64xf32>, vector<2x64xf32> -> vector<2x64xf32>
    %c0_22 = arith.constant 0 : index
    %c0_23 = arith.constant 0 : index
    %31 = vector.load %arg7[%c0_22, %c0_23] : memref<1x64xf32, #tpu.memory_space<vmem>>, vector<1x64xf32>
    %32 = vector.broadcast %31 : vector<1x64xf32> to vector<2x64xf32>
    %33 = arith.addf %30, %32 : vector<2x64xf32>
    %cst_24 = arith.constant 0.000000e+00 : f32
    %34 = vector.broadcast %cst_24 : f32 to vector<2x64xf32>
    %35 = arith.maximumf %33, %34 : vector<2x64xf32>
    %c0_25 = arith.constant 0 : index
    %c0_26 = arith.constant 0 : index
    %36 = vector.load %arg8[%c0_25, %c0_26] : memref<1x64xf32, #tpu.memory_space<vmem>>, vector<1x64xf32>
    %37 = vector.broadcast %36 : vector<1x64xf32> to vector<2x64xf32>
    %38 = arith.mulf %35, %37 : vector<2x64xf32>
    %cst_27 = arith.constant dense<0.000000e+00> : vector<2xf32>
    %39 = vector.multi_reduction <add>, %38, %cst_27 [1] : vector<2x64xf32> to vector<2xf32>
    %40 = vector.shape_cast %39 : vector<2xf32> to vector<2x1xf32>
    %c0_28 = arith.constant 0 : index
    %c0_29 = arith.constant 0 : index
    %41 = vector.load %arg9[%c0_28, %c0_29] : memref<1x1xf32, #tpu.memory_space<vmem>>, vector<1x1xf32>
    %42 = vector.broadcast %41 : vector<1x1xf32> to vector<2x1xf32>
    %43 = arith.addf %40, %42 : vector<2x1xf32>
    %c0_30 = arith.constant 0 : index
    %c0_31 = arith.constant 0 : index
    %44 = vector.load %arg10[%c0_30, %c0_31] : memref<2x1xf32, #tpu.memory_space<vmem>>, vector<2x1xf32>
    tpu.vector_store %arg10[%c0_30, %c0_31], %43 {strides = array<i32>} : memref<2x1xf32, #tpu.memory_space<vmem>>, vector<2x1xf32>,
    return
  }
}

</mosaic_0001>

<llo_original>
// kernel: value_block_forward.1
$region0: #{value_block_forward.1}
  #allocation0 [shape = 'u32[]', space=smem, size = 0x4, offset = 0x4, fixed_abs, tag = 'smem constant byte address 0x4 - core index']
  #allocation1 [shape = 'u32[72,128]{1,0:T(1,128)}', space=vmem, size = 0x9000, scoped, tag = 'internal scratch']
  #allocation2 [shape = 'f32[1,1]{1,0:T(1,128)S(1)}', space=vmem, size = 0x200, scoped, tag = 'scoped memory for value_block_forward.1']
  %s0 = inlined_call_operand.vmem [shape: f32[2,324], index: 0, kind: input, shape index: {}]
  %s1 = inlined_call_operand.vmem [shape: f32[324,243], index: 1, kind: input, shape index: {}]
  %s2 = inlined_call_operand.vmem [shape: f32[1,243], index: 2, kind: input, shape index: {}]
  %s3 = inlined_call_operand.vmem [shape: f32[1,243], index: 3, kind: input, shape index: {}]
  %s4 = inlined_call_operand.vmem [shape: f32[1,243], index: 4, kind: input, shape index: {}]
  %s5 = inlined_call_operand.vmem [shape: f32[243,243], index: 5, kind: input, shape index: {}]
  %s6 = inlined_call_operand.vmem [shape: f32[243,64], index: 6, kind: input, shape index: {}]
  %s7 = inlined_call_operand.vmem [shape: f32[1,64], index: 7, kind: input, shape index: {}]
  %s8 = inlined_call_operand.vmem [shape: f32[1,64], index: 8, kind: input, shape index: {}]
  %s9 = inlined_call_operand.<no memory space> [shape: f32[1,1], index: 9, kind: input, shape index: {}]
  %s10 = inlined_call_operand.vmem [shape: f32[2,1], index: 10, kind: output, shape index: {}]
  %s11 = sld [smem:[#allocation0]]
  $region50: #{value_block_forward.1} parent=0
    _
  %s13 = ssub.s32 1, %s11
  %s14 = scalar_select 0, %s13, %s11
  %v15 = vstv %s9
  %16 = vst [vmem:[#allocation2] sm:$0x1] %v15
  // Predicated region
  $region2: #{value_block_forward.1} parent=0 // pred_check
    _
  $region3: #{value_block_forward.1} parent=0 // pred_check_branch
    %18 = sbr.rel (0) target = $region5
  $region4: #{value_block_forward.1} parent=0 // pred_region
    _
  $region5: #{value_block_forward.1} parent=0 // pred_fallthru
    _
  // Predicated region
  $region6: #{value_block_forward.1} parent=0 // pred_check
    _
  $region7: #{value_block_forward.1} parent=0 // pred_check_branch
    %20 = sbr.rel (0) target = $region9
  $region8: #{value_block_forward.1} parent=0 // pred_region
    _
  $region9: #{value_block_forward.1} parent=0 // pred_fallthru
    _
  // Predicated region
  $region10: #{value_block_forward.1} parent=0 // pred_check
    _
  $region11: #{value_block_forward.1} parent=0 // pred_check_branch
    %22 = sbr.rel (0) target = $region13
  $region12: #{value_block_forward.1} parent=0 // pred_region
    _
  $region13: #{value_block_forward.1} parent=0 // pred_fallthru
    _
  // Predicated region
  $region14: #{value_block_forward.1} parent=0 // pred_check
    _
  $region15: #{value_block_forward.1} parent=0 // pred_check_branch
    %24 = sbr.rel (0) target = $region17
  $region16: #{value_block_forward.1} parent=0 // pred_region
    _
  $region17: #{value_block_forward.1} parent=0 // pred_fallthru
    _
  // Predicated region
  $region18: #{value_block_forward.1} parent=0 // pred_check
    _
  $region19: #{value_block_forward.1} parent=0 // pred_check_branch
    %26 = sbr.rel (0) target = $region21
  $region20: #{value_block_forward.1} parent=0 // pred_region
    _
  $region21: #{value_block_forward.1} parent=0 // pred_fallthru
    _
  // Predicated region
  $region22: #{value_block_forward.1} parent=0 // pred_check
    _
  $region23: #{value_block_forward.1} parent=0 // pred_check_branch
    %28 = sbr.rel (0) target = $region25
  $region24: #{value_block_forward.1} parent=0 // pred_region
    _
  $region25: #{value_block_forward.1} parent=0 // pred_fallthru
    _
  // Predicated region
  $region26: #{value_block_forward.1} parent=0 // pred_check
    _
  $region27: #{value_block_forward.1} parent=0 // pred_check_branch
    %30 = sbr.rel (0) target = $region29
  $region28: #{value_block_forward.1} parent=0 // pred_region
    _
  $region29: #{value_block_forward.1} parent=0 // pred_fallthru
    _
  // Predicated region
  $region30: #{value_block_forward.1} parent=0 // pred_check
    _
  $region31: #{value_block_forward.1} parent=0 // pred_check_branch
    %32 = sbr.rel (0) target = $region33
  $region32: #{value_block_forward.1} parent=0 // pred_region
    _
  $region33: #{value_block_forward.1} parent=0 // pred_fallthru
    _
  // Predicated region
  $region34: #{value_block_forward.1} parent=0 // pred_check
    _
  $region35: #{value_block_forward.1} parent=0 // pred_check_branch
    %34 = sbr.rel (0) target = $region37
  $region36: #{value_block_forward.1} parent=0 // pred_region
    _
  $region37: #{value_block_forward.1} parent=0 // pred_fallthru
    _
  // Predicated region
  $region38: #{value_block_forward.1} parent=0 // pred_check
    _
  $region39: #{value_block_forward.1} parent=0 // pred_check_branch
    %36 = sbr.rel (0) target = $region41
  $region40: #{value_block_forward.1} parent=0 // pred_region
    _
  $region41: #{value_block_forward.1} parent=0 // pred_fallthru
    _
  %v37 = vld [vmem:[%s0] sm:$0x3f]
  %v38 = vld [vmem:[%s1] sm:$0xff]
  %v39 = vld [vmem:[%s1 + $0x8] sm:$0xff]
  %v40 = vld [vmem:[%s1 + $0x10] sm:$0xff]
  %v41 = vld [vmem:[%s1 + $0x18] sm:$0xff]
  %v42 = vld [vmem:[%s1 + $0x20] sm:$0xff]
  %v43 = vld [vmem:[%s1 + $0x28] sm:$0xff]
  %v44 = vld [vmem:[%s1 + $0x30] sm:$0xff]
  %v45 = vld [vmem:[%s1 + $0x38] sm:$0xff]
  %v46 = vld [vmem:[%s1 + $0x40] sm:$0xff]
  %v47 = vld [vmem:[%s1 + $0x48] sm:$0xff]
  %v48 = vld [vmem:[%s1 + $0x50] sm:$0xff]
  %v49 = vld [vmem:[%s1 + $0x58] sm:$0xff]
  %v50 = vld [vmem:[%s1 + $0x60] sm:$0xff]
  %v51 = vld [vmem:[%s1 + $0x68] sm:$0xff]
  %v52 = vld [vmem:[%s1 + $0x70] sm:$0xff]
  %v53 = vld [vmem:[%s1 + $0x78] sm:$0xff]
  %v54 = vld [vmem:[%s1 + $0x80] sm:$0xff]
  %v55 = vld [vmem:[%s1 + $0x88] sm:$0xff]
  %v56 = vld [vmem:[%s1 + $0x90] sm:$0xff]
  %v57 = vld [vmem:[%s1 + $0x98] sm:$0xff]
  %v58 = vld [vmem:[%s1 + $0xa0] sm:$0xff]
  %v59 = vld [vmem:[%s1 + $0xa8] sm:$0xff]
  %v60 = vld [vmem:[%s1 + $0xb0] sm:$0xff]
  %v61 = vld [vmem:[%s1 + $0xb8] sm:$0xff]
  %v62 = vld [vmem:[%s1 + $0xc0] sm:$0xff]
  %v63 = vld [vmem:[%s1 + $0xc8] sm:$0xff]
  %v64 = vld [vmem:[%s1 + $0xd0] sm:$0xff]
  %v65 = vld [vmem:[%s1 + $0xd8] sm:$0xff]
  %v66 = vld [vmem:[%s1 + $0xe0] sm:$0xff]
  %v67 = vld [vmem:[%s1 + $0xe8] sm:$0xff]
  %v68 = vld [vmem:[%s1 + $0xf0] sm:$0xff]
  %v69 = vld [vmem:[%s1 + $0xf8] sm:$0xff]
  %v70 = vld [vmem:[%s1 + $0x100] sm:$0xff]
  %v71 = vld [vmem:[%s1 + $0x108] sm:$0xff]
  %v72 = vld [vmem:[%s1 + $0x110] sm:$0xff]
  %v73 = vld [vmem:[%s1 + $0x118] sm:$0xff]
  %v74 = vld [vmem:[%s1 + $0x120] sm:$0xff]
  %v75 = vld [vmem:[%s1 + $0x128] sm:$0xff]
  %v76 = vld [vmem:[%s1 + $0x130] sm:$0xff]
  %v77 = vld [vmem:[%s1 + $0x138] sm:$0xff]
  %v78 = vld [vmem:[%s1 + $0x140] sm:$0xff]
  %v79 = vld [vmem:[%s1 + $0x148] sm:$0xff]
  %v80 = vld [vmem:[%s1 + $0x150] sm:$0xff]
  %v81 = vld [vmem:[%s1 + $0x158] sm:$0xff]
  %v82 = vld [vmem:[%s1 + $0x160] sm:$0xff]
  %v83 = vld [vmem:[%s1 + $0x168] sm:$0xff]
  %v84 = vld [vmem:[%s1 + $0x170] sm:$0xff]
  %v85 = vld [vmem:[%s1 + $0x178] sm:$0xff]
  %v86 = vld [vmem:[%s1 + $0x180] sm:$0xff]
  %v87 = vld [vmem:[%s1 + $0x188] sm:$0xff]
  %v88 = vld [vmem:[%s1 + $0x190] sm:$0xff]
  %v89 = vld [vmem:[%s1 + $0x198] sm:$0xff]
  %v90 = vld [vmem:[%s1 + $0x1a0] sm:$0xff]
  %v91 = vld [vmem:[%s1 + $0x1a8] sm:$0xff]
  %v92 = vld [vmem:[%s1 + $0x1b0] sm:$0xff]
  %v93 = vld [vmem:[%s1 + $0x1b8] sm:$0xff]
  %v94 = vld [vmem:[%s1 + $0x1c0] sm:$0xff]
  %v95 = vld [vmem:[%s1 + $0x1c8] sm:$0xff]
  %v96 = vld [vmem:[%s1 + $0x1d0] sm:$0xff]
  %v97 = vld [vmem:[%s1 + $0x1d8] sm:$0xff]
  %v98 = vld [vmem:[%s1 + $0x1e0] sm:$0xff]
  %v99 = vld [vmem:[%s1 + $0x1e8] sm:$0xff]
  %v100 = vld [vmem:[%s1 + $0x1f0] sm:$0xff]
  %v101 = vld [vmem:[%s1 + $0x1f8] sm:$0xff]
  %v102 = vld [vmem:[%s1 + $0x200] sm:$0xff]
  %v103 = vld [vmem:[%s1 + $0x208] sm:$0xff]
  %v104 = vld [vmem:[%s1 + $0x210] sm:$0xff]
  %v105 = vld [vmem:[%s1 + $0x218] sm:$0xff]
  %v106 = vld [vmem:[%s1 + $0x220] sm:$0xff]
  %v107 = vld [vmem:[%s1 + $0x228] sm:$0xff]
  %v108 = vld [vmem:[%s1 + $0x230] sm:$0xff]
  %v109 = vld [vmem:[%s1 + $0x238] sm:$0xff]
  %v110 = vld [vmem:[%s1 + $0x240] sm:$0xff]
  %v111 = vld [vmem:[%s1 + $0x248] sm:$0xff]
  %v112 = vld [vmem:[%s1 + $0x250] sm:$0xff]
  %v113 = vld [vmem:[%s1 + $0x258] sm:$0xff]
  %v114 = vld [vmem:[%s1 + $0x260] sm:$0xff]
  %v115 = vld [vmem:[%s1 + $0x268] sm:$0xff]
  %v116 = vld [vmem:[%s1 + $0x270] sm:$0xff]
  %v117 = vld [vmem:[%s1 + $0x278] sm:$0xff]
  %v118 = vld [vmem:[%s1 + $0x280] sm:$0xf]
  %v119 = vld [vmem:[%s1 + $0x288] sm:$0xf]
  %v120 = vld [vmem:[%s2] sm:$0x3]
  %v122 = vperm.slane %v120, 0
  %v123 = vperm.slane %v120, 1
  %127 = vst [vmem:[#allocation1] ss:$4 sm:$0xff] %v37
  %v128 = vld.sshfl [vmem:[#allocation1] sm:$0xff pattern:$0x73625140]
  %v129 = vld.sshfl [vmem:[#allocation1 + $0x8] sm:$0xff pattern:$0x73625140]
  %v130 = vld.sshfl [vmem:[#allocation1 + $0x10] sm:$0xff pattern:$0x73625140]
  %vm133 = vcmask 556032
  %v134 = vsel %vm133, %v130, 0
  %vm136 = vcmask 1043456
  %v138 = vsel %vm136, %v118, 0
  %v141 = vsel %vm136, %v119, 0
  %143 = vmatpush.msra.mxu0 %v68
  %144 = vmatpush.msra.mxu0 %v66
  %145 = vmatpush.msra.mxu0 %v64
  %146 = vmatpush.msra.mxu0 %v62
  %147 = vmatpush.msra.mxu0 %v60
  %148 = vmatpush.msra.mxu0 %v58
  %149 = vmatpush.msra.mxu0 %v56
  %150 = vmatpush.msra.mxu0 %v54
  %151 = vmatpush.msra.mxu0 %v52
  %152 = vmatpush.msra.mxu0 %v50
  %153 = vmatpush.msra.mxu0 %v48
  %154 = vmatpush.msra.mxu0 %v46
  %155 = vmatpush.msra.mxu0 %v44
  %156 = vmatpush.msra.mxu0 %v42
  %157 = vmatpush.msra.mxu0 %v40
  %158 = vmatpush.msra.mxu0 %v38
  %159 = vmatmul.f32.gmra.mxu0 %v128
  %v160 = vpop.f32.mrf.mxu0
  %v161 = vadd.f32 %v122, %v160
  %162 = vdwg.mxu0
  %163 = vmatpush.msra.mxu0 %v100
  %164 = vmatpush.msra.mxu0 %v98
  %165 = vmatpush.msra.mxu0 %v96
  %166 = vmatpush.msra.mxu0 %v94
  %167 = vmatpush.msra.mxu0 %v92
  %168 = vmatpush.msra.mxu0 %v90
  %169 = vmatpush.msra.mxu0 %v88
  %170 = vmatpush.msra.mxu0 %v86
  %171 = vmatpush.msra.mxu0 %v84
  %172 = vmatpush.msra.mxu0 %v82
  %173 = vmatpush.msra.mxu0 %v80
  %174 = vmatpush.msra.mxu0 %v78
  %175 = vmatpush.msra.mxu0 %v76
  %176 = vmatpush.msra.mxu0 %v74
  %177 = vmatpush.msra.mxu0 %v72
  %178 = vmatpush.msra.mxu0 %v70
  %179 = vmatmul.f32.gmra.mxu0 %v129
  %v180 = vpop.f32.mrf.mxu0
  %v181 = vadd.f32 %v161, %v180
  %182 = vdwg.mxu0
  %183 = vmatpush.msra.mxu0 0.0
  %184 = vmatpush.msra.mxu0 0.0
  %185 = vmatpush.msra.mxu0 0.0
  %186 = vmatpush.msra.mxu0 0.0
  %187 = vmatpush.msra.mxu0 0.0
  %188 = vmatpush.msra.mxu0 0.0
  %189 = vmatpush.msra.mxu0 0.0
  %190 = vmatpush.msra.mxu0 %v138
  %191 = vmatpush.msra.mxu0 %v116
  %192 = vmatpush.msra.mxu0 %v114
  %193 = vmatpush.msra.mxu0 %v112
  %194 = vmatpush.msra.mxu0 %v110
  %195 = vmatpush.msra.mxu0 %v108
  %196 = vmatpush.msra.mxu0 %v106
  %197 = vmatpush.msra.mxu0 %v104
  %198 = vmatpush.msra.mxu0 %v102
  %199 = vmatmul.f32.gmra.mxu0 %v134
  %v200 = vpop.f32.mrf.mxu0
  %v201 = vadd.f32 %v181, %v200
  %202 = vdwg.mxu0
  %203 = vmatpush.msra.mxu0 %v69
  %204 = vmatpush.msra.mxu0 %v67
  %205 = vmatpush.msra.mxu0 %v65
  %206 = vmatpush.msra.mxu0 %v63
  %207 = vmatpush.msra.mxu0 %v61
  %208 = vmatpush.msra.mxu0 %v59
  %209 = vmatpush.msra.mxu0 %v57
  %210 = vmatpush.msra.mxu0 %v55
  %211 = vmatpush.msra.mxu0 %v53
  %212 = vmatpush.msra.mxu0 %v51
  %213 = vmatpush.msra.mxu0 %v49
  %214 = vmatpush.msra.mxu0 %v47
  %215 = vmatpush.msra.mxu0 %v45
  %216 = vmatpush.msra.mxu0 %v43
  %217 = vmatpush.msra.mxu0 %v41
  %218 = vmatpush.msra.mxu0 %v39
  %219 = vmatmul.f32.gmra.mxu0 %v128
  %v220 = vpop.f32.mrf.mxu0
  %v221 = vadd.f32 %v123, %v220
  %222 = vdwg.mxu0
  %223 = vmatpush.msra.mxu0 %v101
  %224 = vmatpush.msra.mxu0 %v99
  %225 = vmatpush.msra.mxu0 %v97
  %226 = vmatpush.msra.mxu0 %v95
  %227 = vmatpush.msra.mxu0 %v93
  %228 = vmatpush.msra.mxu0 %v91
  %229 = vmatpush.msra.mxu0 %v89
  %230 = vmatpush.msra.mxu0 %v87
  %231 = vmatpush.msra.mxu0 %v85
  %232 = vmatpush.msra.mxu0 %v83
  %233 = vmatpush.msra.mxu0 %v81
  %234 = vmatpush.msra.mxu0 %v79
  %235 = vmatpush.msra.mxu0 %v77
  %236 = vmatpush.msra.mxu0 %v75
  %237 = vmatpush.msra.mxu0 %v73
  %238 = vmatpush.msra.mxu0 %v71
  %239 = vmatmul.f32.gmra.mxu0 %v129
  %v240 = vpop.f32.mrf.mxu0
  %v241 = vadd.f32 %v221, %v240
  %242 = vdwg.mxu0
  %243 = vmatpush.msra.mxu0 0.0
  %244 = vmatpush.msra.mxu0 0.0
  %245 = vmatpush.msra.mxu0 0.0
  %246 = vmatpush.msra.mxu0 0.0
  %247 = vmatpush.msra.mxu0 0.0
  %248 = vmatpush.msra.mxu0 0.0
  %249 = vmatpush.msra.mxu0 0.0
  %250 = vmatpush.msra.mxu0 %v141
  %251 = vmatpush.msra.mxu0 %v117
  %252 = vmatpush.msra.mxu0 %v115
  %253 = vmatpush.msra.mxu0 %v113
  %254 = vmatpush.msra.mxu0 %v111
  %255 = vmatpush.msra.mxu0 %v109
  %256 = vmatpush.msra.mxu0 %v107
  %257 = vmatpush.msra.mxu0 %v105
  %258 = vmatpush.msra.mxu0 %v103
  %259 = vmatmul.f32.gmra.mxu0 %v134
  %v260 = vpop.f32.mrf.mxu0
  %v261 = vadd.f32 %v241, %v260
  %262 = vdwg.mxu0
  %vm263 = vcmask 1041408
  %v264 = vsel %vm263, %v201, 0.0
  %v265 = vrot.slane %v264, 4
  %v266 = vadd.f32 %v264, %v265
  %v267 = vrot.slane %v266, 2
  %v268 = vadd.f32 %v266, %v267
  %v269 = vrot.slane %v268, 1
  %v270 = vadd.f32 %v268, %v269
  %vm271 = vcmask 934912
  %v272 = vsel %vm271, %v261, 0.0
  %v273 = vrot.slane %v272, 4
  %v274 = vadd.f32 %v272, %v273
  %v275 = vrot.slane %v274, 2
  %v276 = vadd.f32 %v274, %v275
  %v277 = vrot.slane %v276, 1
  %v278 = vadd.f32 %v276, %v277
  %v279 = vld [vmem:[%s5] sm:$0xff]
  %v280 = vld [vmem:[%s5 + $0x8] sm:$0xff]
  %v281 = vld [vmem:[%s5 + $0x10] sm:$0xff]
  %v282 = vld [vmem:[%s5 + $0x18] sm:$0xff]
  %v283 = vld [vmem:[%s5 + $0x20] sm:$0xff]
  %v284 = vld [vmem:[%s5 + $0x28] sm:$0xff]
  %v285 = vld [vmem:[%s5 + $0x30] sm:$0xff]
  %v286 = vld [vmem:[%s5 + $0x38] sm:$0xff]
  %v287 = vld [vmem:[%s5 + $0x40] sm:$0xff]
  %v288 = vld [vmem:[%s5 + $0x48] sm:$0xff]
  %v289 = vld [vmem:[%s5 + $0x50] sm:$0xff]
  %v290 = vld [vmem:[%s5 + $0x58] sm:$0xff]
  %v291 = vld [vmem:[%s5 + $0x60] sm:$0xff]
  %v292 = vld [vmem:[%s5 + $0x68] sm:$0xff]
  %v293 = vld [vmem:[%s5 + $0x70] sm:$0xff]
  %v294 = vld [vmem:[%s5 + $0x78] sm:$0xff]
  %v295 = vld [vmem:[%s5 + $0x80] sm:$0xff]
  %v296 = vld [vmem:[%s5 + $0x88] sm:$0xff]
  %v297 = vld [vmem:[%s5 + $0x90] sm:$0xff]
  %v298 = vld [vmem:[%s5 + $0x98] sm:$0xff]
  %v299 = vld [vmem:[%s5 + $0xa0] sm:$0xff]
  %v300 = vld [vmem:[%s5 + $0xa8] sm:$0xff]
  %v301 = vld [vmem:[%s5 + $0xb0] sm:$0xff]
  %v302 = vld [vmem:[%s5 + $0xb8] sm:$0xff]
  %v303 = vld [vmem:[%s5 + $0xc0] sm:$0xff]
  %v304 = vld [vmem:[%s5 + $0xc8] sm:$0xff]
  %v305 = vld [vmem:[%s5 + $0xd0] sm:$0xff]
  %v306 = vld [vmem:[%s5 + $0xd8] sm:$0xff]
  %v307 = vld [vmem:[%s5 + $0xe0] sm:$0xff]
  %v308 = vld [vmem:[%s5 + $0xe8] sm:$0xff]
  %v309 = vld [vmem:[%s5 + $0xf0] sm:$0xff]
  %v310 = vld [vmem:[%s5 + $0xf8] sm:$0xff]
  %v311 = vld [vmem:[%s5 + $0x100] sm:$0xff]
  %v312 = vld [vmem:[%s5 + $0x108] sm:$0xff]
  %v313 = vld [vmem:[%s5 + $0x110] sm:$0xff]
  %v314 = vld [vmem:[%s5 + $0x118] sm:$0xff]
  %v315 = vld [vmem:[%s5 + $0x120] sm:$0xff]
  %v316 = vld [vmem:[%s5 + $0x128] sm:$0xff]
  %v317 = vld [vmem:[%s5 + $0x130] sm:$0xff]
  %v318 = vld [vmem:[%s5 + $0x138] sm:$0xff]
  %v319 = vld [vmem:[%s5 + $0x140] sm:$0xff]
  %v320 = vld [vmem:[%s5 + $0x148] sm:$0xff]
  %v321 = vld [vmem:[%s5 + $0x150] sm:$0xff]
  %v322 = vld [vmem:[%s5 + $0x158] sm:$0xff]
  %v323 = vld [vmem:[%s5 + $0x160] sm:$0xff]
  %v324 = vld [vmem:[%s5 + $0x168] sm:$0xff]
  %v325 = vld [vmem:[%s5 + $0x170] sm:$0xff]
  %v326 = vld [vmem:[%s5 + $0x178] sm:$0xff]
  %v327 = vld [vmem:[%s5 + $0x180] sm:$0xff]
  %v328 = vld [vmem:[%s5 + $0x188] sm:$0xff]
  %v329 = vld [vmem:[%s5 + $0x190] sm:$0xff]
  %v330 = vld [vmem:[%s5 + $0x198] sm:$0xff]
  %v331 = vld [vmem:[%s5 + $0x1a0] sm:$0xff]
  %v332 = vld [vmem:[%s5 + $0x1a8] sm:$0xff]
  %v333 = vld [vmem:[%s5 + $0x1b0] sm:$0xff]
  %v334 = vld [vmem:[%s5 + $0x1b8] sm:$0xff]
  %v335 = vld [vmem:[%s5 + $0x1c0] sm:$0xff]
  %v336 = vld [vmem:[%s5 + $0x1c8] sm:$0xff]
  %v337 = vld [vmem:[%s5 + $0x1d0] sm:$0xff]
  %v338 = vld [vmem:[%s5 + $0x1d8] sm:$0xff]
  %v339 = vld [vmem:[%s5 + $0x1e0] sm:$0x7]
  %v340 = vld [vmem:[%s5 + $0x1e8] sm:$0x7]
  %vm341 = vcmask 941056
  %v343 = vsel %vm341, %v278, 0
  %vm345 = vcmask 1042432
  %v347 = vsel %vm345, %v339, 0
  %v350 = vsel %vm345, %v340, 0
  %352 = vmatpush.msra.mxu0 %v309
  %353 = vmatpush.msra.mxu0 %v307
  %354 = vmatpush.msra.mxu0 %v305
  %355 = vmatpush.msra.mxu0 %v303
  %356 = vmatpush.msra.mxu0 %v301
  %357 = vmatpush.msra.mxu0 %v299
  %358 = vmatpush.msra.mxu0 %v297
  %359 = vmatpush.msra.mxu0 %v295
  %360 = vmatpush.msra.mxu0 %v293
  %361 = vmatpush.msra.mxu0 %v291
  %362 = vmatpush.msra.mxu0 %v289
  %363 = vmatpush.msra.mxu0 %v287
  %364 = vmatpush.msra.mxu0 %v285
  %365 = vmatpush.msra.mxu0 %v283
  %366 = vmatpush.msra.mxu0 %v281
  %367 = vmatpush.msra.mxu0 %v279
  %368 = vmatmul.f32.gmra.mxu0 %v270
  %v369 = vpop.f32.mrf.mxu0
  %v370 = vadd.f32 0.0, %v369
  %371 = vdwg.mxu0
  %372 = vmatpush.msra.mxu0 0.0
  %373 = vmatpush.msra.mxu0 %v347
  %374 = vmatpush.msra.mxu0 %v337
  %375 = vmatpush.msra.mxu0 %v335
  %376 = vmatpush.msra.mxu0 %v333
  %377 = vmatpush.msra.mxu0 %v331
  %378 = vmatpush.msra.mxu0 %v329
  %379 = vmatpush.msra.mxu0 %v327
  %380 = vmatpush.msra.mxu0 %v325
  %381 = vmatpush.msra.mxu0 %v323
  %382 = vmatpush.msra.mxu0 %v321
  %383 = vmatpush.msra.mxu0 %v319
  %384 = vmatpush.msra.mxu0 %v317
  %385 = vmatpush.msra.mxu0 %v315
  %386 = vmatpush.msra.mxu0 %v313
  %387 = vmatpush.msra.mxu0 %v311
  %388 = vmatmul.f32.gmra.mxu0 %v343
  %v389 = vpop.f32.mrf.mxu0
  %v390 = vadd.f32 %v370, %v389
  %391 = vdwg.mxu0
  %392 = vmatpush.msra.mxu0 %v310
  %393 = vmatpush.msra.mxu0 %v308
  %394 = vmatpush.msra.mxu0 %v306
  %395 = vmatpush.msra.mxu0 %v304
  %396 = vmatpush.msra.mxu0 %v302
  %397 = vmatpush.msra.mxu0 %v300
  %398 = vmatpush.msra.mxu0 %v298
  %399 = vmatpush.msra.mxu0 %v296
  %400 = vmatpush.msra.mxu0 %v294
  %401 = vmatpush.msra.mxu0 %v292
  %402 = vmatpush.msra.mxu0 %v290
  %403 = vmatpush.msra.mxu0 %v288
  %404 = vmatpush.msra.mxu0 %v286
  %405 = vmatpush.msra.mxu0 %v284
  %406 = vmatpush.msra.mxu0 %v282
  %407 = vmatpush.msra.mxu0 %v280
  %408 = vmatmul.f32.gmra.mxu0 %v270
  %v409 = vpop.f32.mrf.mxu0
  %v410 = vadd.f32 0.0, %v409
  %411 = vdwg.mxu0
  %412 = vmatpush.msra.mxu0 0.0
  %413 = vmatpush.msra.mxu0 %v350
  %414 = vmatpush.msra.mxu0 %v338
  %415 = vmatpush.msra.mxu0 %v336
  %416 = vmatpush.msra.mxu0 %v334
  %417 = vmatpush.msra.mxu0 %v332
  %418 = vmatpush.msra.mxu0 %v330
  %419 = vmatpush.msra.mxu0 %v328
  %420 = vmatpush.msra.mxu0 %v326
  %421 = vmatpush.msra.mxu0 %v324
  %422 = vmatpush.msra.mxu0 %v322
  %423 = vmatpush.msra.mxu0 %v320
  %424 = vmatpush.msra.mxu0 %v318
  %425 = vmatpush.msra.mxu0 %v316
  %426 = vmatpush.msra.mxu0 %v314
  %427 = vmatpush.msra.mxu0 %v312
  %428 = vmatmul.f32.gmra.mxu0 %v343
  %v429 = vpop.f32.mrf.mxu0
  %v430 = vadd.f32 %v410, %v429
  %431 = vdwg.mxu0
  %v432 = vperm.slane %v390, 0
  %v433 = vperm.slane %v430, 0
  %v434 = vsub.f32 %v201, %v432
  %v435 = vsub.f32 %v261, %v433
  %v436 = vmul.f32 %v434, %v434
  %v437 = vmul.f32 %v435, %v435
  %v438 = vsel %vm263, %v436, 0.0
  %v439 = vrot.slane %v438, 4
  %v440 = vadd.f32 %v438, %v439
  %v441 = vrot.slane %v440, 2
  %v442 = vadd.f32 %v440, %v441
  %v443 = vrot.slane %v442, 1
  %v444 = vadd.f32 %v442, %v443
  %v445 = vsel %vm271, %v437, 0.0
  %v446 = vrot.slane %v445, 4
  %v447 = vadd.f32 %v445, %v446
  %v448 = vrot.slane %v447, 2
  %v449 = vadd.f32 %v447, %v448
  %v450 = vrot.slane %v449, 1
  %v451 = vadd.f32 %v449, %v450
  %v452 = vld [vmem:[%s3] sm:$0x3]
  %v454 = vsel %vm341, %v451, 0
  %456 = vmatpush.msra.mxu0 %v309
  %457 = vmatpush.msra.mxu0 %v307
  %458 = vmatpush.msra.mxu0 %v305
  %459 = vmatpush.msra.mxu0 %v303
  %460 = vmatpush.msra.mxu0 %v301
  %461 = vmatpush.msra.mxu0 %v299
  %462 = vmatpush.msra.mxu0 %v297
  %463 = vmatpush.msra.mxu0 %v295
  %464 = vmatpush.msra.mxu0 %v293
  %465 = vmatpush.msra.mxu0 %v291
  %466 = vmatpush.msra.mxu0 %v289
  %467 = vmatpush.msra.mxu0 %v287
  %468 = vmatpush.msra.mxu0 %v285
  %469 = vmatpush.msra.mxu0 %v283
  %470 = vmatpush.msra.mxu0 %v281
  %471 = vmatpush.msra.mxu0 %v279
  %472 = vmatmul.f32.gmra.mxu0 %v444
  %v473 = vpop.f32.mrf.mxu0
  %v474 = vadd.f32 1e-05, %v473
  %475 = vdwg.mxu0
  %476 = vmatpush.msra.mxu0 0.0
  %477 = vmatpush.msra.mxu0 %v347
  %478 = vmatpush.msra.mxu0 %v337
  %479 = vmatpush.msra.mxu0 %v335
  %480 = vmatpush.msra.mxu0 %v333
  %481 = vmatpush.msra.mxu0 %v331
  %482 = vmatpush.msra.mxu0 %v329
  %483 = vmatpush.msra.mxu0 %v327
  %484 = vmatpush.msra.mxu0 %v325
  %485 = vmatpush.msra.mxu0 %v323
  %486 = vmatpush.msra.mxu0 %v321
  %487 = vmatpush.msra.mxu0 %v319
  %488 = vmatpush.msra.mxu0 %v317
  %489 = vmatpush.msra.mxu0 %v315
  %490 = vmatpush.msra.mxu0 %v313
  %491 = vmatpush.msra.mxu0 %v311
  %492 = vmatmul.f32.gmra.mxu0 %v454
  %v493 = vpop.f32.mrf.mxu0
  %v494 = vadd.f32 %v474, %v493
  %495 = vdwg.mxu0
  %496 = vmatpush.msra.mxu0 %v310
  %497 = vmatpush.msra.mxu0 %v308
  %498 = vmatpush.msra.mxu0 %v306
  %499 = vmatpush.msra.mxu0 %v304
  %500 = vmatpush.msra.mxu0 %v302
  %501 = vmatpush.msra.mxu0 %v300
  %502 = vmatpush.msra.mxu0 %v298
  %503 = vmatpush.msra.mxu0 %v296
  %504 = vmatpush.msra.mxu0 %v294
  %505 = vmatpush.msra.mxu0 %v292
  %506 = vmatpush.msra.mxu0 %v290
  %507 = vmatpush.msra.mxu0 %v288
  %508 = vmatpush.msra.mxu0 %v286
  %509 = vmatpush.msra.mxu0 %v284
  %510 = vmatpush.msra.mxu0 %v282
  %511 = vmatpush.msra.mxu0 %v280
  %512 = vmatmul.f32.gmra.mxu0 %v444
  %v513 = vpop.f32.mrf.mxu0
  %v514 = vadd.f32 1e-05, %v513
  %515 = vdwg.mxu0
  %516 = vmatpush.msra.mxu0 0.0
  %517 = vmatpush.msra.mxu0 %v350
  %518 = vmatpush.msra.mxu0 %v338
  %519 = vmatpush.msra.mxu0 %v336
  %520 = vmatpush.msra.mxu0 %v334
  %521 = vmatpush.msra.mxu0 %v332
  %522 = vmatpush.msra.mxu0 %v330
  %523 = vmatpush.msra.mxu0 %v328
  %524 = vmatpush.msra.mxu0 %v326
  %525 = vmatpush.msra.mxu0 %v324
  %526 = vmatpush.msra.mxu0 %v322
  %527 = vmatpush.msra.mxu0 %v320
  %528 = vmatpush.msra.mxu0 %v318
  %529 = vmatpush.msra.mxu0 %v316
  %530 = vmatpush.msra.mxu0 %v314
  %531 = vmatpush.msra.mxu0 %v312
  %532 = vmatmul.f32.gmra.mxu0 %v454
  %v533 = vpop.f32.mrf.mxu0
  %v534 = vadd.f32 %v514, %v533
  %535 = vdwg.mxu0
  %v536 = vrsqrt.pop %v494
  %v537 = vmul.f32 %v536, %v494
  %v538 = vmul.f32 %v537, %v536
  %v539 = vmul.f32 0.5, %v538
  %v540 = vsub.f32 1.5, %v539
  %v541 = vmul.f32 %v536, %v540
  %vm542 = vweird.f32 %v494
  %vm543 = vweird.f32 %v536
  %vm544 = vmor %vm542, %vm543
  %v545 = vsel %vm544, %v536, %v541
  %v546 = vrsqrt.pop %v534
  %v547 = vmul.f32 %v546, %v534
  %v548 = vmul.f32 %v547, %v546
  %v549 = vmul.f32 0.5, %v548
  %v550 = vsub.f32 1.5, %v549
  %v551 = vmul.f32 %v546, %v550
  %vm552 = vweird.f32 %v534
  %vm553 = vweird.f32 %v546
  %vm554 = vmor %vm552, %vm553
  %v555 = vsel %vm554, %v546, %v551
  %v558 = vrot.slane %v555, 7
  %vm559 = vcmask 1040384
  %v560 = vsel %vm559, %v545, %v558
  %v562 = vmul.f32 %v452, %v560
  %v564 = vperm.slane %v562, 0
  %v565 = vperm.slane %v562, 1
  %v568 = vmul.f32 %v434, %v564
  %v569 = vmul.f32 %v435, %v565
  %v570 = vld [vmem:[%s4] sm:$0x3]
  %v572 = vperm.slane %v570, 0
  %v573 = vperm.slane %v570, 1
  %v576 = vadd.f32 %v568, %v572
  %v577 = vadd.f32 %v569, %v573
  %v578 = vmax.f32 %v576, 0.0
  %v579 = vmax.f32 %v577, 0.0
  %v580 = vld [vmem:[%s6] sm:$0xff]
  %v581 = vld [vmem:[%s6 + $0x8] sm:$0xff]
  %v582 = vld [vmem:[%s6 + $0x10] sm:$0xff]
  %v583 = vld [vmem:[%s6 + $0x18] sm:$0xff]
  %v584 = vld [vmem:[%s6 + $0x20] sm:$0xff]
  %v585 = vld [vmem:[%s6 + $0x28] sm:$0xff]
  %v586 = vld [vmem:[%s6 + $0x30] sm:$0xff]
  %v587 = vld [vmem:[%s6 + $0x38] sm:$0xff]
  %v588 = vld [vmem:[%s6 + $0x40] sm:$0xff]
  %v589 = vld [vmem:[%s6 + $0x48] sm:$0xff]
  %v590 = vld [vmem:[%s6 + $0x50] sm:$0xff]
  %v591 = vld [vmem:[%s6 + $0x58] sm:$0xff]
  %v592 = vld [vmem:[%s6 + $0x60] sm:$0xff]
  %v593 = vld [vmem:[%s6 + $0x68] sm:$0xff]
  %v594 = vld [vmem:[%s6 + $0x70] sm:$0xff]
  %v595 = vld [vmem:[%s6 + $0x78] sm:$0xff]
  %v596 = vld [vmem:[%s6 + $0x80] sm:$0xff]
  %v597 = vld [vmem:[%s6 + $0x88] sm:$0xff]
  %v598 = vld [vmem:[%s6 + $0x90] sm:$0xff]
  %v599 = vld [vmem:[%s6 + $0x98] sm:$0xff]
  %v600 = vld [vmem:[%s6 + $0xa0] sm:$0xff]
  %v601 = vld [vmem:[%s6 + $0xa8] sm:$0xff]
  %v602 = vld [vmem:[%s6 + $0xb0] sm:$0xff]
  %v603 = vld [vmem:[%s6 + $0xb8] sm:$0xff]
  %v604 = vld [vmem:[%s6 + $0xc0] sm:$0xff]
  %v605 = vld [vmem:[%s6 + $0xc8] sm:$0xff]
  %v606 = vld [vmem:[%s6 + $0xd0] sm:$0xff]
  %v607 = vld [vmem:[%s6 + $0xd8] sm:$0xff]
  %v608 = vld [vmem:[%s6 + $0xe0] sm:$0xff]
  %v609 = vld [vmem:[%s6 + $0xe8] sm:$0xff]
  %v610 = vld [vmem:[%s6 + $0xf0] sm:$0x7]
  %v611 = vld [vmem:[%s7] sm:$0x1]
  %v613 = vperm.slane %v611, 0
  %v616 = vsel %vm341, %v579, 0
  %v619 = vsel %vm345, %v610, 0
  %621 = vmatpush.msra.mxu0 %v595
  %622 = vmatpush.msra.mxu0 %v594
  %623 = vmatpush.msra.mxu0 %v593
  %624 = vmatpush.msra.mxu0 %v592
  %625 = vmatpush.msra.mxu0 %v591
  %626 = vmatpush.msra.mxu0 %v590
  %627 = vmatpush.msra.mxu0 %v589
  %628 = vmatpush.msra.mxu0 %v588
  %629 = vmatpush.msra.mxu0 %v587
  %630 = vmatpush.msra.mxu0 %v586
  %631 = vmatpush.msra.mxu0 %v585
  %632 = vmatpush.msra.mxu0 %v584
  %633 = vmatpush.msra.mxu0 %v583
  %634 = vmatpush.msra.mxu0 %v582
  %635 = vmatpush.msra.mxu0 %v581
  %636 = vmatpush.msra.mxu0 %v580
  %637 = vmatmul.f32.gmra.mxu0 %v578
  %v638 = vpop.f32.mrf.mxu0
  %v639 = vadd.f32 %v613, %v638
  %640 = vdwg.mxu0
  %641 = vmatpush.msra.mxu0 0.0
  %642 = vmatpush.msra.mxu0 %v619
  %643 = vmatpush.msra.mxu0 %v609
  %644 = vmatpush.msra.mxu0 %v608
  %645 = vmatpush.msra.mxu0 %v607
  %646 = vmatpush.msra.mxu0 %v606
  %647 = vmatpush.msra.mxu0 %v605
  %648 = vmatpush.msra.mxu0 %v604
  %649 = vmatpush.msra.mxu0 %v603
  %650 = vmatpush.msra.mxu0 %v602
  %651 = vmatpush.msra.mxu0 %v601
  %652 = vmatpush.msra.mxu0 %v600
  %653 = vmatpush.msra.mxu0 %v599
  %654 = vmatpush.msra.mxu0 %v598
  %655 = vmatpush.msra.mxu0 %v597
  %656 = vmatpush.msra.mxu0 %v596
  %657 = vmatmul.f32.gmra.mxu0 %v616
  %v658 = vpop.f32.mrf.mxu0
  %v659 = vadd.f32 %v639, %v658
  %660 = vdwg.mxu0
  %v661 = vmax.f32 %v659, 0.0
  %v662 = vld [vmem:[%s8] sm:$0x1]
  %v664 = vperm.slane %v662, 0
  %v666 = vmul.f32 %v661, %v664
  %vm667 = vcmask 517120
  %v668 = vsel %vm667, %v666, 0.0
  %669 = vadd.xlane.f32.xlu0 %v668
  %v670 = vpop.xlane.xlu0 %669
  %v671 = vld [vmem:[#allocation2] sm:$0x1]
  %v673 = vperm.slane %v671, 0
  %v675 = vadd.f32 %v670, %v673
  %vm676 = vcmask 1024
  %677 = vst.msk [vmem:[%s10] sm:$0x3] %vm676, %v675
  // Predicated region
  $region42: #{value_block_forward.1} parent=0 // pred_check
    _
  $region43: #{value_block_forward.1} parent=0 // pred_check_branch
    %679 = sbr.rel (0) target = $region45
  $region44: #{value_block_forward.1} parent=0 // pred_region
    _
  $region45: #{value_block_forward.1} parent=0 // pred_fallthru
    _
  // Predicated region
  $region46: #{value_block_forward.1} parent=0 // pred_check
    _
  $region47: #{value_block_forward.1} parent=0 // pred_check_branch
    %681 = sbr.rel (0) target = $region49
  $region48: #{value_block_forward.1} parent=0 // pred_region
    _
  $region49: #{value_block_forward.1} parent=0 // pred_fallthru
    _

</llo_original>
